<compile_context>
chip_gen: v7x
topology: tpu7x:2x2x1
jax: 0.10.0
libtpu: 0.0.40
codegen_flags: <defaults>
</compile_context>

<pallas_src>
import jax
import jax.numpy as jnp
from jax.experimental import pallas as pl
from jax.experimental.pallas import tpu as pltpu

IN_DIM, H1, H2, OUT_DIM = 28 * 28, 128, 64, 10
H2_PAD, OUT_PAD = 128, 128                     # lane-aligned hidden/output widths
B_TOTAL = H1 + H2_PAD + OUT_PAD                # 384-wide coalesced bias slab
DEFAULT_TB = 1024                              # batch tile (sweep 512-2048)


def _mlp_kernel(x_ref, w1_ref, w2_ref, w3_ref, b_ref, o_ref):
    # Static, 128-aligned slices of the coalesced bias slab (f32).
    b1 = b_ref[:, 0:H1]
    b2 = b_ref[:, H1:H1 + H2_PAD]
    b3 = b_ref[:, H1 + H2_PAD:B_TOTAL]

    # In-kernel bf16 cast of the f32 x tile (VPU) -- avoids a wrapper-side
    # padded-bf16 copy of x in HBM.  Dots run on the MXU with f32 accumulate.
    x = x_ref[...].astype(jnp.bfloat16)

    # fc1 + ReLU   (dropout is identity in eval mode)
    h1 = jnp.dot(x, w1_ref[...], preferred_element_type=jnp.float32)
    h1 = jnp.maximum(h1 + b1, 0.0).astype(jnp.bfloat16)
    # fc2 + ReLU
    h2 = jnp.dot(h1, w2_ref[...], preferred_element_type=jnp.float32)
    h2 = jnp.maximum(h2 + b2, 0.0).astype(jnp.bfloat16)
    # fc3 (logits, no activation) -> lane-dense padded output (128 wide)
    logits = jnp.dot(h2, w3_ref[...], preferred_element_type=jnp.float32)
    o_ref[...] = (logits + b3).astype(o_ref.dtype)


def digit_classifier_forward(x, params, tile_b=DEFAULT_TB):
    """x: [B, 1, 28, 28] or [B, 784] float32. Returns [B, 10] f32 logits."""
    w1, b1, w2, b2, w3, b3 = params
    B = x.shape[0]
    x2d = x.reshape(B, IN_DIM).astype(jnp.float32)

    # ---- batch tiling: sublane-align B, large tile to amortize step cost ----
    b_sub = pl.cdiv(B, 8) * 8
    TB = min(tile_b, b_sub)
    B_pad = pl.cdiv(b_sub, TB) * TB
    n_tiles = B_pad // TB
    if B_pad != B:
        x2d = jnp.pad(x2d, ((0, B_pad - B), (0, 0)))

    # ---- weights: bf16, lane-aligned N (pad only the tiny H2/OUT dims) ----
    w1b = w1.astype(jnp.bfloat16)                                               # [784, 128]
    w2b = jnp.pad(w2, ((0, 0), (0, H2_PAD - H2))).astype(jnp.bfloat16)          # [128, 128]
    w3b = jnp.pad(w3, ((0, H2_PAD - H2), (0, OUT_PAD - OUT_DIM))).astype(jnp.bfloat16)  # [128, 128]
    bcat = jnp.concatenate(
        [b1, jnp.pad(b2, ((0, 0), (0, H2_PAD - H2))),
         jnp.pad(b3, ((0, 0), (0, OUT_PAD - OUT_DIM)))], axis=1
    ).astype(jnp.float32)                                                       # [1, 384]

    # Advisory cost hint (lets XLA overlap neighbor ops with the custom call).
    flops = 2 * B_pad * (IN_DIM * H1 + H1 * H2_PAD + H2_PAD * OUT_PAD)
    weight_bytes = 2 * (IN_DIM * H1 + H1 * H2_PAD + H2_PAD * OUT_PAD) + 4 * B_TOTAL
    bytes_accessed = B_pad * IN_DIM * 4 + B_pad * OUT_PAD * 4 + weight_bytes
    cost = pl.CostEstimate(flops=flops, transcendentals=0,
                           bytes_accessed=bytes_accessed)

    out = pl.pallas_call(
        _mlp_kernel,
        out_shape=jax.ShapeDtypeStruct((B_pad, OUT_PAD), jnp.float32),
        grid=(n_tiles,),
        in_specs=[
            # x tile: (TB, 784); 784 == full last dim so the (8,128) rule holds.
            pl.BlockSpec((TB, IN_DIM), lambda i: (i, 0)),
            # weights/bias: constant index maps -> VMEM-resident across grid.
            pl.BlockSpec((IN_DIM, H1), lambda i: (0, 0)),
            pl.BlockSpec((H1, H2_PAD), lambda i: (0, 0)),
            pl.BlockSpec((H2_PAD, OUT_PAD), lambda i: (0, 0)),
            pl.BlockSpec((1, B_TOTAL), lambda i: (0, 0)),
        ],
        out_specs=pl.BlockSpec((TB, OUT_PAD), lambda i: (i, 0)),
        compiler_params=pltpu.CompilerParams(
            dimension_semantics=("parallel",),
            vmem_limit_bytes=32 * 1024 * 1024,
        ),
        cost_estimate=cost,
    )(x2d, w1b, w2b, w3b, bcat)

    return out[:B, :OUT_DIM]


def init_params(key):
    """Deterministic init mimicking nn.Linear's uniform(-1/sqrt(fan_in), +)."""
    ks = jax.random.split(key, 6)

    def linear(kw, kb, fan_in, fan_out):
        bound = 1.0 / jnp.sqrt(float(fan_in))
        w = jax.random.uniform(kw, (fan_in, fan_out), jnp.float32, -bound, bound)
        b = jax.random.uniform(kb, (1, fan_out), jnp.float32, -bound, bound)
        return w, b

    w1, b1 = linear(ks[0], ks[1], IN_DIM, H1)
    w2, b2 = linear(ks[2], ks[3], H1, H2)
    w3, b3 = linear(ks[4], ks[5], H2, OUT_DIM)
    return (w1, b1, w2, b2, w3, b3)


if __name__ == "__main__":
    key = jax.random.PRNGKey(0)
    k_x, k_p = jax.random.split(key)

    B = 8
    x = jax.random.normal(k_x, (B, 1, 28, 28), dtype=jnp.float32)
    params = init_params(k_p)

    logits = digit_classifier_forward(x, params)
    jax.block_until_ready(logits)

    # Reference check in plain JAX, matching the kernel's bf16-operand /
    # f32-accumulate numerics.
    w1, b1, w2, b2, w3, b3 = params
    xb = x.reshape(B, IN_DIM).astype(jnp.bfloat16)
    w1b, w2b, w3b = (w.astype(jnp.bfloat16) for w in (w1, w2, w3))
    h1 = jnp.maximum(jnp.dot(xb, w1b, preferred_element_type=jnp.float32) + b1, 0.0)
    h2 = jnp.maximum(
        jnp.dot(h1.astype(jnp.bfloat16), w2b, preferred_element_type=jnp.float32) + b2, 0.0)
    ref = jnp.dot(h2.astype(jnp.bfloat16), w3b, preferred_element_type=jnp.float32) + b3

    assert logits.shape == (B, OUT_DIM)
    assert jnp.allclose(logits, ref, atol=2e-2, rtol=2e-2)

    print("KERNEL_OK")
</pallas_src>

<mosaic_0001>
module attributes {stable_mosaic.version = 11 : i64} {
  func.func @_mlp_kernel(%arg0: i32, %arg1: memref<8x784xf32, #tpu.memory_space<vmem>>, %arg2: memref<784x128xbf16, #tpu.memory_space<vmem>>, %arg3: memref<128x128xbf16, #tpu.memory_space<vmem>>, %arg4: memref<128x128xbf16, #tpu.memory_space<vmem>>, %arg5: memref<1x384xf32, #tpu.memory_space<vmem>>, %arg6: memref<8x128xf32, #tpu.memory_space<vmem>>) attributes {dimension_semantics = [#tpu.dimension_semantics<parallel>], iteration_bounds = array<i64: 1>, scalar_prefetch = 0 : i64, scratch_operands = 0 : i64, tpu.core_type = #tpu.core_type<tc>, window_params = [{transform_indices = @transform_0, window_bounds = array<i64: 8, 784>}, {pipeline_mode = #tpu.pipeline_mode<synchronous>, transform_indices = @transform_1, window_bounds = array<i64: 784, 128>}, {pipeline_mode = #tpu.pipeline_mode<synchronous>, transform_indices = @transform_2, window_bounds = array<i64: 128, 128>}, {pipeline_mode = #tpu.pipeline_mode<synchronous>, transform_indices = @transform_3, window_bounds = array<i64: 128, 128>}, {pipeline_mode = #tpu.pipeline_mode<synchronous>, transform_indices = @transform_4, window_bounds = array<i64: 1, 384>}, {transform_indices = @transform_5, window_bounds = array<i64: 8, 128>}]} {
    %c0 = arith.constant 0 : index
    %c0_0 = arith.constant 0 : index
    %0 = vector.load %arg5[%c0, %c0_0] : memref<1x384xf32, #tpu.memory_space<vmem>>, vector<1x128xf32>
    %c0_1 = arith.constant 0 : index
    %c128 = arith.constant 128 : index
    %1 = vector.load %arg5[%c0_1, %c128] : memref<1x384xf32, #tpu.memory_space<vmem>>, vector<1x128xf32>
    %c0_2 = arith.constant 0 : index
    %c256 = arith.constant 256 : index
    %2 = vector.load %arg5[%c0_2, %c256] : memref<1x384xf32, #tpu.memory_space<vmem>>, vector<1x128xf32>
    %c0_3 = arith.constant 0 : index
    %c0_4 = arith.constant 0 : index
    %3 = vector.load %arg1[%c0_3, %c0_4] : memref<8x784xf32, #tpu.memory_space<vmem>>, vector<8x784xf32>
    %4 = arith.truncf %3 : vector<8x784xf32> to vector<8x784xbf16>
    %c0_5 = arith.constant 0 : index
    %c0_6 = arith.constant 0 : index
    %5 = vector.load %arg2[%c0_5, %c0_6] : memref<784x128xbf16, #tpu.memory_space<vmem>>, vector<784x128xbf16>
    %cst = arith.constant dense<0.000000e+00> : vector<8x128xf32>
    %6 = tpu.matmul %4, %5, %cst {dimension_numbers = #tpu.dot_dimension_numbers<[1], [0], [0], [1], [0, 0, 1, 1], [], []>} : vector<8x784xbf16>, vector<784x128xbf16>, vector<8x128xf32> -> vector<8x128xf32>
    %7 = vector.broadcast %0 : vector<1x128xf32> to vector<8x128xf32>
    %8 = arith.addf %6, %7 : vector<8x128xf32>
    %cst_7 = arith.constant 0.000000e+00 : f32
    %9 = vector.broadcast %cst_7 : f32 to vector<8x128xf32>
    %10 = arith.maximumf %8, %9 : vector<8x128xf32>
    %11 = arith.truncf %10 : vector<8x128xf32> to vector<8x128xbf16>
    %c0_8 = arith.constant 0 : index
    %c0_9 = arith.constant 0 : index
    %12 = vector.load %arg3[%c0_8, %c0_9] : memref<128x128xbf16, #tpu.memory_space<vmem>>, vector<128x128xbf16>
    %cst_10 = arith.constant dense<0.000000e+00> : vector<8x128xf32>
    %13 = tpu.matmul %11, %12, %cst_10 {dimension_numbers = #tpu.dot_dimension_numbers<[1], [0], [0], [1], [0, 0, 1, 1], [], []>} : vector<8x128xbf16>, vector<128x128xbf16>, vector<8x128xf32> -> vector<8x128xf32>
    %14 = vector.broadcast %1 : vector<1x128xf32> to vector<8x128xf32>
    %15 = arith.addf %13, %14 : vector<8x128xf32>
    %cst_11 = arith.constant 0.000000e+00 : f32
    %16 = vector.broadcast %cst_11 : f32 to vector<8x128xf32>
    %17 = arith.maximumf %15, %16 : vector<8x128xf32>
    %18 = arith.truncf %17 : vector<8x128xf32> to vector<8x128xbf16>
    %c0_12 = arith.constant 0 : index
    %c0_13 = arith.constant 0 : index
    %19 = vector.load %arg4[%c0_12, %c0_13] : memref<128x128xbf16, #tpu.memory_space<vmem>>, vector<128x128xbf16>
    %cst_14 = arith.constant dense<0.000000e+00> : vector<8x128xf32>
    %20 = tpu.matmul %18, %19, %cst_14 {dimension_numbers = #tpu.dot_dimension_numbers<[1], [0], [0], [1], [0, 0, 1, 1], [], []>} : vector<8x128xbf16>, vector<128x128xbf16>, vector<8x128xf32> -> vector<8x128xf32>
    %21 = vector.broadcast %2 : vector<1x128xf32> to vector<8x128xf32>
    %22 = arith.addf %20, %21 : vector<8x128xf32>
    %c0_15 = arith.constant 0 : index
    %c0_16 = arith.constant 0 : index
    %23 = vector.load %arg6[%c0_15, %c0_16] : memref<8x128xf32, #tpu.memory_space<vmem>>, vector<8x128xf32>
    tpu.vector_store %arg6[%c0_15, %c0_16], %22 {strides = array<i32>} : memref<8x128xf32, #tpu.memory_space<vmem>>, vector<8x128xf32>,
    return
  }
  func.func @transform_0(%arg0: i32) -> (i32, i32) {
    %c0_i32 = arith.constant 0 : i32
    %c0_i32_0 = arith.constant 0 : i32
    return %arg0, %c0_i32 : i32, i32
  }
  func.func @transform_1(%arg0: i32) -> (i32, i32) {
    %c0_i32 = arith.constant 0 : i32
    %c0_i32_0 = arith.constant 0 : i32
    %c0_i32_1 = arith.constant 0 : i32
    return %c0_i32, %c0_i32_0 : i32, i32
  }
  func.func @transform_2(%arg0: i32) -> (i32, i32) {
    %c0_i32 = arith.constant 0 : i32
    %c0_i32_0 = arith.constant 0 : i32
    %c0_i32_1 = arith.constant 0 : i32
    return %c0_i32, %c0_i32_0 : i32, i32
  }
  func.func @transform_3(%arg0: i32) -> (i32, i32) {
    %c0_i32 = arith.constant 0 : i32
    %c0_i32_0 = arith.constant 0 : i32
    %c0_i32_1 = arith.constant 0 : i32
    return %c0_i32, %c0_i32_0 : i32, i32
  }
  func.func @transform_4(%arg0: i32) -> (i32, i32) {
    %c0_i32 = arith.constant 0 : i32
    %c0_i32_0 = arith.constant 0 : i32
    %c0_i32_1 = arith.constant 0 : i32
    return %c0_i32, %c0_i32_0 : i32, i32
  }
  func.func @transform_5(%arg0: i32) -> (i32, i32) {
    %c0_i32 = arith.constant 0 : i32
    %c0_i32_0 = arith.constant 0 : i32
    return %arg0, %c0_i32 : i32, i32
  }
}

</mosaic_0001>

<llo_original>
// kernel: tpu_custom_call.1
$region0: #{tpu_custom_call.1}
  #allocation0 [shape = 'u32[]', space=smem, size = 0x4, offset = 0x4, fixed_abs, tag = 'smem constant byte address 0x4 - core index']
  #allocation1 [shape = 'u32[144,128]{1,0:T(1,128)}', space=vmem, size = 0x12000, scoped, tag = 'internal scratch']
  %s0 = inlined_call_operand.hbm [shape: f32[8,784], index: 0, kind: input, shape index: {}]
  %s1 = inlined_call_operand.hbm [shape: bf16[784,128], index: 1, kind: input, shape index: {}]
  %s2 = inlined_call_operand.hbm [shape: bf16[128,128], index: 2, kind: input, shape index: {}]
  %s3 = inlined_call_operand.hbm [shape: bf16[128,128], index: 3, kind: input, shape index: {}]
  %s4 = inlined_call_operand.vmem [shape: f32[1,384], index: 4, kind: input, shape index: {}]
  %s5 = inlined_call_operand.hbm [shape: f32[8,128], index: 5, kind: output, shape index: {}]
  %s6 = sld [smem:[#allocation0]]
  $region46: #{tpu_custom_call.1} parent=0
    _
  %s8 = ssub.s32 1, %s6
  %s9 = scalar_select 0, %s8, %s6
  $region1: #{tpu_custom_call.1} parent=0
    #allocation2 [shape = 'u8[28672]{0}', space=vmem, size = 0x7000, scoped, tag = 'input window, operand 0, single buffered']
    #allocation3 [shape = 's32[1]{0}', space=sflag, size = 0x4, scoped, tag = 'scoped memory for tpu_custom_call.1']
    #allocation4 [shape = 's32[1]{0}', space=sflag, size = 0x4, scoped, tag = 'scoped memory for tpu_custom_call.1']
    #allocation5 [shape = 'u8[200704]{0}', space=vmem, size = 0x31000, scoped, tag = 'input window, operand 1, single buffered']
    #allocation6 [shape = 's32[1]{0}', space=sflag, size = 0x4, scoped, tag = 'scoped memory for tpu_custom_call.1']
    #allocation7 [shape = 'u8[32768]{0}', space=vmem, size = 0x8000, scoped, tag = 'input window, operand 2, single buffered']
    #allocation8 [shape = 'u8[32768]{0}', space=vmem, size = 0x8000, scoped, tag = 'input window, operand 3, single buffered']
    #allocation9 [shape = 's32[1]{0}', space=sflag, size = 0x4, scoped, tag = 'scoped memory for tpu_custom_call.1']
    #allocation10 [shape = 'u8[4096]{0}', space=vmem, size = 0x1000, scoped, tag = 'output window, operand 0, single buffered']
    %10 = vsyncpa [#allocation3], 0
    %11 = vsyncpa [#allocation6], 0
    %12 = vsyncpa [#allocation9], 0
    %13 = vsyncpa [#allocation4], 0
    // Predicated region
    $region2: #{tpu_custom_call.1} parent=1 // pred_check
      _
    $region3: #{tpu_custom_call.1} parent=1 // pred_check_branch
      %15 = sbr.rel (0) target = $region5
    $region4: #{tpu_custom_call.1} parent=1 // pred_region
      %s17 = ssub.s32 896, 896
      %18 = vsyncadd [#allocation3], %s17
      %s20 = sshll.u32 [#allocation2], 4
      %s21 = int_to_ptr.vmem [resolvable:$true] %s20
      %23 = dma.hbm_to_vmem [thread:$0]  %s0, 896, %s21, [#allocation3]
    $region5: #{tpu_custom_call.1} parent=1 // pred_fallthru
      _
    // Predicated region
    $region6: #{tpu_custom_call.1} parent=1 // pred_check
      _
    $region7: #{tpu_custom_call.1} parent=1 // pred_check_branch
      %25 = sbr.rel (0) target = $region9
    $region8: #{tpu_custom_call.1} parent=1 // pred_region
      %s27 = ssub.s32 6272, 6272
      %28 = vsyncadd [#allocation6], %s27
      %s29 = sshll.u32 [#allocation5], 4
      %s30 = int_to_ptr.vmem [resolvable:$true] %s29
      %35 = dma.hbm_to_vmem [thread:$0]  %s1, 6272, %s30, [#allocation6], 64, 64, 4
    $region9: #{tpu_custom_call.1} parent=1 // pred_fallthru
      _
    // Predicated region
    $region10: #{tpu_custom_call.1} parent=1 // pred_check
      _
    $region11: #{tpu_custom_call.1} parent=1 // pred_check_branch
      %37 = sbr.rel (0) target = $region13
    $region12: #{tpu_custom_call.1} parent=1 // pred_region
      %s39 = ssub.s32 1024, 1024
      %40 = vsyncadd [#allocation6], %s39
      %s41 = sshll.u32 [#allocation7], 4
      %s42 = int_to_ptr.vmem [resolvable:$true] %s41
      %47 = dma.hbm_to_vmem [thread:$0]  %s2, 1024, %s42, [#allocation6], 64, 64, 4
    $region13: #{tpu_custom_call.1} parent=1 // pred_fallthru
      _
    // Predicated region
    $region14: #{tpu_custom_call.1} parent=1 // pred_check
      _
    $region15: #{tpu_custom_call.1} parent=1 // pred_check_branch
      %49 = sbr.rel (0) target = $region17
    $region16: #{tpu_custom_call.1} parent=1 // pred_region
      %s51 = ssub.s32 1024, 1024
      %52 = vsyncadd [#allocation9], %s51
      %s53 = sshll.u32 [#allocation8], 4
      %s54 = int_to_ptr.vmem [resolvable:$true] %s53
      %59 = dma.hbm_to_vmem [thread:$0]  %s3, 1024, %s54, [#allocation9], 64, 64, 4
    $region17: #{tpu_custom_call.1} parent=1 // pred_fallthru
      _
    // Predicated region
    $region18: #{tpu_custom_call.1} parent=1 // pred_check
      _
    $region19: #{tpu_custom_call.1} parent=1 // pred_check_branch
      %61 = sbr.rel (0) target = $region21
    $region20: #{tpu_custom_call.1} parent=1 // pred_region
      _
    $region21: #{tpu_custom_call.1} parent=1 // pred_fallthru
      _
    // Predicated region
    $region22: #{tpu_custom_call.1} parent=1 // pred_check
      _
    $region23: #{tpu_custom_call.1} parent=1 // pred_check_branch
      %63 = sbr.rel (0) target = $region25
    $region24: #{tpu_custom_call.1} parent=1 // pred_region
      %64 = dma.done [#allocation3], 896
    $region25: #{tpu_custom_call.1} parent=1 // pred_fallthru
      _
    // Predicated region
    $region26: #{tpu_custom_call.1} parent=1 // pred_check
      _
    $region27: #{tpu_custom_call.1} parent=1 // pred_check_branch
      %66 = sbr.rel (0) target = $region29
    $region28: #{tpu_custom_call.1} parent=1 // pred_region
      %67 = dma.done [#allocation6], 6272
    $region29: #{tpu_custom_call.1} parent=1 // pred_fallthru
      _
    // Predicated region
    $region30: #{tpu_custom_call.1} parent=1 // pred_check
      _
    $region31: #{tpu_custom_call.1} parent=1 // pred_check_branch
      %69 = sbr.rel (0) target = $region33
    $region32: #{tpu_custom_call.1} parent=1 // pred_region
      %70 = dma.done [#allocation6], 1024
    $region33: #{tpu_custom_call.1} parent=1 // pred_fallthru
      _
    // Predicated region
    $region34: #{tpu_custom_call.1} parent=1 // pred_check
      _
    $region35: #{tpu_custom_call.1} parent=1 // pred_check_branch
      %72 = sbr.rel (0) target = $region37
    $region36: #{tpu_custom_call.1} parent=1 // pred_region
      %73 = dma.done [#allocation9], 1024
    $region37: #{tpu_custom_call.1} parent=1 // pred_fallthru
      _
    %v75 = vld [vmem:[%s4] sm:$0x1]
    %v76 = vld [vmem:[%s4 + $0x1] sm:$0x1]
    %v77 = vld [vmem:[%s4 + $0x2] sm:$0x1]
    %v78 = vld [vmem:[#allocation2] sm:$0xff]
    %v79 = vld [vmem:[#allocation2 + $0x8] sm:$0xff]
    %v80 = vld [vmem:[#allocation2 + $0x10] sm:$0xff]
    %v81 = vld [vmem:[#allocation2 + $0x18] sm:$0xff]
    %v82 = vld [vmem:[#allocation2 + $0x20] sm:$0xff]
    %v83 = vld [vmem:[#allocation2 + $0x28] sm:$0xff]
    %v84 = vld [vmem:[#allocation2 + $0x30] sm:$0xff]
    %v85 = vpack.c.bf16 %v78, %v78
    %v86 = vpack.c.bf16 %v79, %v79
    %v87 = vpack.c.bf16 %v80, %v80
    %v88 = vpack.c.bf16 %v81, %v81
    %v89 = vpack.c.bf16 %v82, %v82
    %v90 = vpack.c.bf16 %v83, %v83
    %v91 = vpack.c.bf16 %v84, %v84
    %v92 = vld [vmem:[#allocation5] sm:$0xf]
    %v93 = vld [vmem:[#allocation5 + $0x4] sm:$0xf]
    %v94 = vld [vmem:[#allocation5 + $0x8] sm:$0xf]
    %v95 = vld [vmem:[#allocation5 + $0xc] sm:$0xf]
    %v96 = vld [vmem:[#allocation5 + $0x10] sm:$0xf]
    %v97 = vld [vmem:[#allocation5 + $0x14] sm:$0xf]
    %v98 = vld [vmem:[#allocation5 + $0x18] sm:$0xf]
    %v99 = vld [vmem:[#allocation5 + $0x1c] sm:$0xf]
    %v100 = vld [vmem:[#allocation5 + $0x20] sm:$0xf]
    %v101 = vld [vmem:[#allocation5 + $0x24] sm:$0xf]
    %v102 = vld [vmem:[#allocation5 + $0x28] sm:$0xf]
    %v103 = vld [vmem:[#allocation5 + $0x2c] sm:$0xf]
    %v104 = vld [vmem:[#allocation5 + $0x30] sm:$0xf]
    %v105 = vld [vmem:[#allocation5 + $0x34] sm:$0xf]
    %v106 = vld [vmem:[#allocation5 + $0x38] sm:$0xf]
    %v107 = vld [vmem:[#allocation5 + $0x3c] sm:$0xf]
    %v108 = vld [vmem:[#allocation5 + $0x40] sm:$0xf]
    %v109 = vld [vmem:[#allocation5 + $0x44] sm:$0xf]
    %v110 = vld [vmem:[#allocation5 + $0x48] sm:$0xf]
    %v111 = vld [vmem:[#allocation5 + $0x4c] sm:$0xf]
    %v112 = vld [vmem:[#allocation5 + $0x50] sm:$0xf]
    %v113 = vld [vmem:[#allocation5 + $0x54] sm:$0xf]
    %v114 = vld [vmem:[#allocation5 + $0x58] sm:$0xf]
    %v115 = vld [vmem:[#allocation5 + $0x5c] sm:$0xf]
    %v116 = vld [vmem:[#allocation5 + $0x60] sm:$0xf]
    %v117 = vld [vmem:[#allocation5 + $0x64] sm:$0xf]
    %v118 = vld [vmem:[#allocation5 + $0x68] sm:$0xf]
    %v119 = vld [vmem:[#allocation5 + $0x6c] sm:$0xf]
    %v120 = vld [vmem:[#allocation5 + $0x70] sm:$0xf]
    %v121 = vld [vmem:[#allocation5 + $0x74] sm:$0xf]
    %v122 = vld [vmem:[#allocation5 + $0x78] sm:$0xf]
    %v123 = vld [vmem:[#allocation5 + $0x7c] sm:$0xf]
    %v124 = vld [vmem:[#allocation5 + $0x80] sm:$0xf]
    %v125 = vld [vmem:[#allocation5 + $0x84] sm:$0xf]
    %v126 = vld [vmem:[#allocation5 + $0x88] sm:$0xf]
    %v127 = vld [vmem:[#allocation5 + $0x8c] sm:$0xf]
    %v128 = vld [vmem:[#allocation5 + $0x90] sm:$0xf]
    %v129 = vld [vmem:[#allocation5 + $0x94] sm:$0xf]
    %v130 = vld [vmem:[#allocation5 + $0x98] sm:$0xf]
    %v131 = vld [vmem:[#allocation5 + $0x9c] sm:$0xf]
    %v132 = vld [vmem:[#allocation5 + $0xa0] sm:$0xf]
    %v133 = vld [vmem:[#allocation5 + $0xa4] sm:$0xf]
    %v134 = vld [vmem:[#allocation5 + $0xa8] sm:$0xf]
    %v135 = vld [vmem:[#allocation5 + $0xac] sm:$0xf]
    %v136 = vld [vmem:[#allocation5 + $0xb0] sm:$0xf]
    %v137 = vld [vmem:[#allocation5 + $0xb4] sm:$0xf]
    %v138 = vld [vmem:[#allocation5 + $0xb8] sm:$0xf]
    %v139 = vld [vmem:[#allocation5 + $0xbc] sm:$0xf]
    %v140 = vld [vmem:[#allocation5 + $0xc0] sm:$0xf]
    %v141 = vld [vmem:[#allocation5 + $0xc4] sm:$0xf]
    %v142 = vld [vmem:[#allocation5 + $0xc8] sm:$0xf]
    %v143 = vld [vmem:[#allocation5 + $0xcc] sm:$0xf]
    %v144 = vld [vmem:[#allocation5 + $0xd0] sm:$0xf]
    %v145 = vld [vmem:[#allocation5 + $0xd4] sm:$0xf]
    %v146 = vld [vmem:[#allocation5 + $0xd8] sm:$0xf]
    %v147 = vld [vmem:[#allocation5 + $0xdc] sm:$0xf]
    %v148 = vld [vmem:[#allocation5 + $0xe0] sm:$0xf]
    %v149 = vld [vmem:[#allocation5 + $0xe4] sm:$0xf]
    %v150 = vld [vmem:[#allocation5 + $0xe8] sm:$0xf]
    %v151 = vld [vmem:[#allocation5 + $0xec] sm:$0xf]
    %v152 = vld [vmem:[#allocation5 + $0xf0] sm:$0xf]
    %v153 = vld [vmem:[#allocation5 + $0xf4] sm:$0xf]
    %v154 = vld [vmem:[#allocation5 + $0xf8] sm:$0xf]
    %v155 = vld [vmem:[#allocation5 + $0xfc] sm:$0xf]
    %v156 = vld [vmem:[#allocation5 + $0x100] sm:$0xf]
    %v157 = vld [vmem:[#allocation5 + $0x104] sm:$0xf]
    %v158 = vld [vmem:[#allocation5 + $0x108] sm:$0xf]
    %v159 = vld [vmem:[#allocation5 + $0x10c] sm:$0xf]
    %v160 = vld [vmem:[#allocation5 + $0x110] sm:$0xf]
    %v161 = vld [vmem:[#allocation5 + $0x114] sm:$0xf]
    %v162 = vld [vmem:[#allocation5 + $0x118] sm:$0xf]
    %v163 = vld [vmem:[#allocation5 + $0x11c] sm:$0xf]
    %v164 = vld [vmem:[#allocation5 + $0x120] sm:$0xf]
    %v165 = vld [vmem:[#allocation5 + $0x124] sm:$0xf]
    %v166 = vld [vmem:[#allocation5 + $0x128] sm:$0xf]
    %v167 = vld [vmem:[#allocation5 + $0x12c] sm:$0xf]
    %v168 = vld [vmem:[#allocation5 + $0x130] sm:$0xf]
    %v169 = vld [vmem:[#allocation5 + $0x134] sm:$0xf]
    %v170 = vld [vmem:[#allocation5 + $0x138] sm:$0xf]
    %v171 = vld [vmem:[#allocation5 + $0x13c] sm:$0xf]
    %v172 = vld [vmem:[#allocation5 + $0x140] sm:$0xf]
    %v173 = vld [vmem:[#allocation5 + $0x144] sm:$0xf]
    %v174 = vld [vmem:[#allocation5 + $0x148] sm:$0xf]
    %v175 = vld [vmem:[#allocation5 + $0x14c] sm:$0xf]
    %v176 = vld [vmem:[#allocation5 + $0x150] sm:$0xf]
    %v177 = vld [vmem:[#allocation5 + $0x154] sm:$0xf]
    %v178 = vld [vmem:[#allocation5 + $0x158] sm:$0xf]
    %v179 = vld [vmem:[#allocation5 + $0x15c] sm:$0xf]
    %v180 = vld [vmem:[#allocation5 + $0x160] sm:$0xf]
    %v181 = vld [vmem:[#allocation5 + $0x164] sm:$0xf]
    %v182 = vld [vmem:[#allocation5 + $0x168] sm:$0xf]
    %v183 = vld [vmem:[#allocation5 + $0x16c] sm:$0xf]
    %v184 = vld [vmem:[#allocation5 + $0x170] sm:$0xf]
    %v185 = vld [vmem:[#allocation5 + $0x174] sm:$0xf]
    %v186 = vld [vmem:[#allocation5 + $0x178] sm:$0xf]
    %v187 = vld [vmem:[#allocation5 + $0x17c] sm:$0xf]
    %v188 = vld [vmem:[#allocation5 + $0x180] sm:$0xf]
    %v189 = vld [vmem:[#allocation5 + $0x184] sm:$0xf]
    %v191 = vlaneseq
    %v192 = vshrl.u32 %v191, 7
    %v193 = vsub.s32 0, %v192
    %v194 = vrot.slane %v75, %v193
    %v294 = vunpack.c.l.b16 %v92
    %v295 = vunpack.c.l.b16 %v93
    %v296 = vunpack.c.l.b16 %v94
    %v297 = vunpack.c.l.b16 %v95
    %v298 = vunpack.c.l.b16 %v96
    %v299 = vunpack.c.l.b16 %v97
    %v300 = vunpack.c.l.b16 %v98
    %v301 = vunpack.c.l.b16 %v99
    %v302 = vunpack.c.l.b16 %v100
    %v303 = vunpack.c.l.b16 %v101
    %v304 = vunpack.c.l.b16 %v102
    %v305 = vunpack.c.l.b16 %v103
    %v306 = vunpack.c.l.b16 %v104
    %v307 = vunpack.c.l.b16 %v105
    %v308 = vunpack.c.l.b16 %v106
    %v309 = vunpack.c.l.b16 %v107
    %v310 = vunpack.c.l.b16 %v108
    %v311 = vunpack.c.l.b16 %v109
    %v312 = vunpack.c.l.b16 %v110
    %v313 = vunpack.c.l.b16 %v111
    %v314 = vunpack.c.l.b16 %v112
    %v315 = vunpack.c.l.b16 %v113
    %v316 = vunpack.c.l.b16 %v114
    %v317 = vunpack.c.l.b16 %v115
    %v318 = vunpack.c.l.b16 %v116
    %v319 = vunpack.c.l.b16 %v117
    %v320 = vunpack.c.l.b16 %v118
    %v321 = vunpack.c.l.b16 %v119
    %v322 = vunpack.c.l.b16 %v120
    %v323 = vunpack.c.l.b16 %v121
    %v324 = vunpack.c.l.b16 %v122
    %v325 = vunpack.c.l.b16 %v123
    %v326 = vunpack.c.l.b16 %v124
    %v327 = vunpack.c.l.b16 %v125
    %v328 = vunpack.c.l.b16 %v126
    %v329 = vunpack.c.l.b16 %v127
    %v330 = vunpack.c.l.b16 %v128
    %v331 = vunpack.c.l.b16 %v129
    %v332 = vunpack.c.l.b16 %v130
    %v333 = vunpack.c.l.b16 %v131
    %v334 = vunpack.c.l.b16 %v132
    %v335 = vunpack.c.l.b16 %v133
    %v336 = vunpack.c.l.b16 %v134
    %v337 = vunpack.c.l.b16 %v135
    %v338 = vunpack.c.l.b16 %v136
    %v339 = vunpack.c.l.b16 %v137
    %v340 = vunpack.c.l.b16 %v138
    %v341 = vunpack.c.l.b16 %v139
    %v342 = vunpack.c.l.b16 %v140
    %v343 = vunpack.c.l.b16 %v141
    %v344 = vunpack.c.l.b16 %v142
    %v345 = vunpack.c.l.b16 %v143
    %v346 = vunpack.c.l.b16 %v144
    %v347 = vunpack.c.l.b16 %v145
    %v348 = vunpack.c.l.b16 %v146
    %v349 = vunpack.c.l.b16 %v147
    %v350 = vunpack.c.l.b16 %v148
    %v351 = vunpack.c.l.b16 %v149
    %v352 = vunpack.c.l.b16 %v150
    %v353 = vunpack.c.l.b16 %v151
    %v354 = vunpack.c.l.b16 %v152
    %v355 = vunpack.c.l.b16 %v153
    %v356 = vunpack.c.l.b16 %v154
    %v357 = vunpack.c.l.b16 %v155
    %v358 = vunpack.c.l.b16 %v156
    %v359 = vunpack.c.l.b16 %v157
    %v360 = vunpack.c.l.b16 %v158
    %v361 = vunpack.c.l.b16 %v159
    %v362 = vunpack.c.l.b16 %v160
    %v363 = vunpack.c.l.b16 %v161
    %v364 = vunpack.c.l.b16 %v162
    %v365 = vunpack.c.l.b16 %v163
    %v366 = vunpack.c.l.b16 %v164
    %v367 = vunpack.c.l.b16 %v165
    %v368 = vunpack.c.l.b16 %v166
    %v369 = vunpack.c.l.b16 %v167
    %v370 = vunpack.c.l.b16 %v168
    %v371 = vunpack.c.l.b16 %v169
    %v372 = vunpack.c.l.b16 %v170
    %v373 = vunpack.c.l.b16 %v171
    %v374 = vunpack.c.l.b16 %v172
    %v375 = vunpack.c.l.b16 %v173
    %v376 = vunpack.c.l.b16 %v174
    %v377 = vunpack.c.l.b16 %v175
    %v378 = vunpack.c.l.b16 %v176
    %v379 = vunpack.c.l.b16 %v177
    %v380 = vunpack.c.l.b16 %v178
    %v381 = vunpack.c.l.b16 %v179
    %v382 = vunpack.c.l.b16 %v180
    %v383 = vunpack.c.l.b16 %v181
    %v384 = vunpack.c.l.b16 %v182
    %v385 = vunpack.c.l.b16 %v183
    %v386 = vunpack.c.l.b16 %v184
    %v387 = vunpack.c.l.b16 %v185
    %v388 = vunpack.c.l.b16 %v186
    %v389 = vunpack.c.l.b16 %v187
    %v390 = vunpack.c.l.b16 %v188
    %v391 = vunpack.c.l.b16 %v189
    %v392 = vpack.c.b16 %v295, %v294
    %v393 = vpack.c.b16 %v297, %v296
    %v394 = vpack.c.b16 %v299, %v298
    %v395 = vpack.c.b16 %v301, %v300
    %v396 = vpack.c.b16 %v303, %v302
    %v397 = vpack.c.b16 %v305, %v304
    %v398 = vpack.c.b16 %v307, %v306
    %v399 = vpack.c.b16 %v309, %v308
    %v400 = vpack.c.b16 %v311, %v310
    %v401 = vpack.c.b16 %v313, %v312
    %v402 = vpack.c.b16 %v315, %v314
    %v403 = vpack.c.b16 %v317, %v316
    %v404 = vpack.c.b16 %v319, %v318
    %v405 = vpack.c.b16 %v321, %v320
    %v406 = vpack.c.b16 %v323, %v322
    %v407 = vpack.c.b16 %v325, %v324
    %v408 = vpack.c.b16 %v327, %v326
    %v409 = vpack.c.b16 %v329, %v328
    %v410 = vpack.c.b16 %v331, %v330
    %v411 = vpack.c.b16 %v333, %v332
    %v412 = vpack.c.b16 %v335, %v334
    %v413 = vpack.c.b16 %v337, %v336
    %v414 = vpack.c.b16 %v339, %v338
    %v415 = vpack.c.b16 %v341, %v340
    %v416 = vpack.c.b16 %v343, %v342
    %v417 = vpack.c.b16 %v345, %v344
    %v418 = vpack.c.b16 %v347, %v346
    %v419 = vpack.c.b16 %v349, %v348
    %v420 = vpack.c.b16 %v351, %v350
    %v421 = vpack.c.b16 %v353, %v352
    %v422 = vpack.c.b16 %v355, %v354
    %v423 = vpack.c.b16 %v357, %v356
    %v424 = vpack.c.b16 %v359, %v358
    %v425 = vpack.c.b16 %v361, %v360
    %v426 = vpack.c.b16 %v363, %v362
    %v427 = vpack.c.b16 %v365, %v364
    %v428 = vpack.c.b16 %v367, %v366
    %v429 = vpack.c.b16 %v369, %v368
    %v430 = vpack.c.b16 %v371, %v370
    %v431 = vpack.c.b16 %v373, %v372
    %v432 = vpack.c.b16 %v375, %v374
    %v433 = vpack.c.b16 %v377, %v376
    %v434 = vpack.c.b16 %v379, %v378
    %v435 = vpack.c.b16 %v381, %v380
    %v436 = vpack.c.b16 %v383, %v382
    %v437 = vpack.c.b16 %v385, %v384
    %v438 = vpack.c.b16 %v387, %v386
    %v439 = vpack.c.b16 %v389, %v388
    %v440 = vpack.c.b16 %v391, %v390
    %vm490 = vcmask 130048
    %v492 = vsel %vm490, %v91, 0
    %494 = vmatprep.subr.bf16.mxu0 0
    %495 = vmatpush1.bf16.msra.mxu0 %v392
    %496 = vmatprep.subr.bf16.mxu0 0
    %497 = vmatpush1.bf16.msra.mxu0 %v393
    %498 = vmatprep.subr.bf16.mxu0 0
    %499 = vmatpush1.bf16.msra.mxu0 %v394
    %500 = vmatprep.subr.bf16.mxu0 0
    %501 = vmatpush1.bf16.msra.mxu0 %v395
    %502 = vmatprep.subr.bf16.mxu0 0
    %503 = vmatpush1.bf16.msra.mxu0 %v396
    %504 = vmatprep.subr.bf16.mxu0 0
    %505 = vmatpush1.bf16.msra.mxu0 %v397
    %506 = vmatprep.subr.bf16.mxu0 0
    %507 = vmatpush1.bf16.msra.mxu0 %v398
    %508 = vmatprep.subr.bf16.mxu0 0
    %509 = vmatpush1.bf16.msra.mxu0 %v399
    %510 = vmatprep.subr.bf16.mxu0 0
    %511 = vmatpush1.bf16.msra.mxu0 %v400
    %512 = vmatprep.subr.bf16.mxu0 0
    %513 = vmatpush1.bf16.msra.mxu0 %v401
    %514 = vmatprep.subr.bf16.mxu0 0
    %515 = vmatpush1.bf16.msra.mxu0 %v402
    %516 = vmatprep.subr.bf16.mxu0 0
    %517 = vmatpush1.bf16.msra.mxu0 %v403
    %518 = vmatprep.subr.bf16.mxu0 0
    %519 = vmatpush1.bf16.msra.mxu0 %v404
    %520 = vmatprep.subr.bf16.mxu0 0
    %521 = vmatpush1.bf16.msra.mxu0 %v405
    %522 = vmatprep.subr.bf16.mxu0 0
    %523 = vmatpush1.bf16.msra.mxu0 %v406
    %524 = vmatprep.subr.bf16.mxu0 0
    %525 = vmatpush1.bf16.msra.mxu0 %v407
    %526 = vmatprep.mubr.bf16.mxu0 %v86
    %527 = vmatmul.mubr.bf16.gmra.mrb[0].mxu0 %v85
    %v528 = vpop.f32.mrb[0].mxu0
    %v529 = vadd.f32 %v194, %v528
    %v530 = vpop.f32.mrb[0].mxu0
    %v531 = vpop.f32.mrb[0].mxu0
    %v532 = vpop.f32.mrb[0].mxu0
    %533 = vdwg.mxu0
    %534 = vmatprep.subr.bf16.mxu0 0
    %535 = vmatpush1.bf16.msra.mxu0 %v408
    %536 = vmatprep.subr.bf16.mxu0 0
    %537 = vmatpush1.bf16.msra.mxu0 %v409
    %538 = vmatprep.subr.bf16.mxu0 0
    %539 = vmatpush1.bf16.msra.mxu0 %v410
    %540 = vmatprep.subr.bf16.mxu0 0
    %541 = vmatpush1.bf16.msra.mxu0 %v411
    %542 = vmatprep.subr.bf16.mxu0 0
    %543 = vmatpush1.bf16.msra.mxu0 %v412
    %544 = vmatprep.subr.bf16.mxu0 0
    %545 = vmatpush1.bf16.msra.mxu0 %v413
    %546 = vmatprep.subr.bf16.mxu0 0
    %547 = vmatpush1.bf16.msra.mxu0 %v414
    %548 = vmatprep.subr.bf16.mxu0 0
    %549 = vmatpush1.bf16.msra.mxu0 %v415
    %550 = vmatprep.subr.bf16.mxu0 0
    %551 = vmatpush1.bf16.msra.mxu0 %v416
    %552 = vmatprep.subr.bf16.mxu0 0
    %553 = vmatpush1.bf16.msra.mxu0 %v417
    %554 = vmatprep.subr.bf16.mxu0 0
    %555 = vmatpush1.bf16.msra.mxu0 %v418
    %556 = vmatprep.subr.bf16.mxu0 0
    %557 = vmatpush1.bf16.msra.mxu0 %v419
    %558 = vmatprep.subr.bf16.mxu0 0
    %559 = vmatpush1.bf16.msra.mxu0 %v420
    %560 = vmatprep.subr.bf16.mxu0 0
    %561 = vmatpush1.bf16.msra.mxu0 %v421
    %562 = vmatprep.subr.bf16.mxu0 0
    %563 = vmatpush1.bf16.msra.mxu0 %v422
    %564 = vmatprep.subr.bf16.mxu0 0
    %565 = vmatpush1.bf16.msra.mxu0 %v423
    %566 = vmatprep.mubr.bf16.mxu0 %v88
    %567 = vmatmul.mubr.bf16.gmra.mrb[0].mxu0 %v87
    %v568 = vpop.f32.mrb[0].mxu0
    %v569 = vadd.f32 %v529, %v568
    %v570 = vpop.f32.mrb[0].mxu0
    %v571 = vpop.f32.mrb[0].mxu0
    %v572 = vpop.f32.mrb[0].mxu0
    %573 = vdwg.mxu0
    %574 = vmatprep.subr.bf16.mxu0 0
    %575 = vmatpush1.bf16.msra.mxu0 %v424
    %576 = vmatprep.subr.bf16.mxu0 0
    %577 = vmatpush1.bf16.msra.mxu0 %v425
    %578 = vmatprep.subr.bf16.mxu0 0
    %579 = vmatpush1.bf16.msra.mxu0 %v426
    %580 = vmatprep.subr.bf16.mxu0 0
    %581 = vmatpush1.bf16.msra.mxu0 %v427
    %582 = vmatprep.subr.bf16.mxu0 0
    %583 = vmatpush1.bf16.msra.mxu0 %v428
    %584 = vmatprep.subr.bf16.mxu0 0
    %585 = vmatpush1.bf16.msra.mxu0 %v429
    %586 = vmatprep.subr.bf16.mxu0 0
    %587 = vmatpush1.bf16.msra.mxu0 %v430
    %588 = vmatprep.subr.bf16.mxu0 0
    %589 = vmatpush1.bf16.msra.mxu0 %v431
    %590 = vmatprep.subr.bf16.mxu0 0
    %591 = vmatpush1.bf16.msra.mxu0 %v432
    %592 = vmatprep.subr.bf16.mxu0 0
    %593 = vmatpush1.bf16.msra.mxu0 %v433
    %594 = vmatprep.subr.bf16.mxu0 0
    %595 = vmatpush1.bf16.msra.mxu0 %v434
    %596 = vmatprep.subr.bf16.mxu0 0
    %597 = vmatpush1.bf16.msra.mxu0 %v435
    %598 = vmatprep.subr.bf16.mxu0 0
    %599 = vmatpush1.bf16.msra.mxu0 %v436
    %600 = vmatprep.subr.bf16.mxu0 0
    %601 = vmatpush1.bf16.msra.mxu0 %v437
    %602 = vmatprep.subr.bf16.mxu0 0
    %603 = vmatpush1.bf16.msra.mxu0 %v438
    %604 = vmatprep.subr.bf16.mxu0 0
    %605 = vmatpush1.bf16.msra.mxu0 %v439
    %606 = vmatprep.mubr.bf16.mxu0 %v90
    %607 = vmatmul.mubr.bf16.gmra.mrb[0].mxu0 %v89
    %v608 = vpop.f32.mrb[0].mxu0
    %v609 = vadd.f32 %v569, %v608
    %v610 = vpop.f32.mrb[0].mxu0
    %v611 = vpop.f32.mrb[0].mxu0
    %v612 = vpop.f32.mrb[0].mxu0
    %613 = vdwg.mxu0
    %614 = vmatprep.subr.bf16.mxu0 0
    %615 = vmatpush1.bf16.msra.mxu0 %v440
    %616 = vmatprep.subr.bf16.mxu0 0
    %617 = vmatpush1.bf16.msra.mxu0 0
    %618 = vmatprep.subr.bf16.mxu0 0
    %619 = vmatpush1.bf16.msra.mxu0 0
    %620 = vmatprep.subr.bf16.mxu0 0
    %621 = vmatpush1.bf16.msra.mxu0 0
    %622 = vmatprep.subr.bf16.mxu0 0
    %623 = vmatpush1.bf16.msra.mxu0 0
    %624 = vmatprep.subr.bf16.mxu0 0
    %625 = vmatpush1.bf16.msra.mxu0 0
    %626 = vmatprep.subr.bf16.mxu0 0
    %627 = vmatpush1.bf16.msra.mxu0 0
    %628 = vmatprep.subr.bf16.mxu0 0
    %629 = vmatpush1.bf16.msra.mxu0 0
    %630 = vmatprep.subr.bf16.mxu0 0
    %631 = vmatpush1.bf16.msra.mxu0 0
    %632 = vmatprep.subr.bf16.mxu0 0
    %633 = vmatpush1.bf16.msra.mxu0 0
    %634 = vmatprep.subr.bf16.mxu0 0
    %635 = vmatpush1.bf16.msra.mxu0 0
    %636 = vmatprep.subr.bf16.mxu0 0
    %637 = vmatpush1.bf16.msra.mxu0 0
    %638 = vmatprep.subr.bf16.mxu0 0
    %639 = vmatpush1.bf16.msra.mxu0 0
    %640 = vmatprep.subr.bf16.mxu0 0
    %641 = vmatpush1.bf16.msra.mxu0 0
    %642 = vmatprep.subr.bf16.mxu0 0
    %643 = vmatpush1.bf16.msra.mxu0 0
    %644 = vmatprep.subr.bf16.mxu0 0
    %645 = vmatpush1.bf16.msra.mxu0 0
    %646 = vmatprep.mubr.bf16.mxu0 0
    %647 = vmatmul.mubr.bf16.gmra.mrb[0].mxu0 %v492
    %v648 = vpop.f32.mrb[0].mxu0
    %v649 = vadd.f32 %v609, %v648
    %v650 = vpop.f32.mrb[0].mxu0
    %v651 = vpop.f32.mrb[0].mxu0
    %v652 = vpop.f32.mrb[0].mxu0
    %653 = vdwg.mxu0
    %v654 = vmax.f32 %v649, 0.0
    %v655 = vpack.c.bf16 %v654, %v654
    %v656 = vld [vmem:[#allocation7] sm:$0xf]
    %v657 = vld [vmem:[#allocation7 + $0x4] sm:$0xf]
    %v658 = vld [vmem:[#allocation7 + $0x8] sm:$0xf]
    %v659 = vld [vmem:[#allocation7 + $0xc] sm:$0xf]
    %v660 = vld [vmem:[#allocation7 + $0x10] sm:$0xf]
    %v661 = vld [vmem:[#allocation7 + $0x14] sm:$0xf]
    %v662 = vld [vmem:[#allocation7 + $0x18] sm:$0xf]
    %v663 = vld [vmem:[#allocation7 + $0x1c] sm:$0xf]
    %v664 = vld [vmem:[#allocation7 + $0x20] sm:$0xf]
    %v665 = vld [vmem:[#allocation7 + $0x24] sm:$0xf]
    %v666 = vld [vmem:[#allocation7 + $0x28] sm:$0xf]
    %v667 = vld [vmem:[#allocation7 + $0x2c] sm:$0xf]
    %v668 = vld [vmem:[#allocation7 + $0x30] sm:$0xf]
    %v669 = vld [vmem:[#allocation7 + $0x34] sm:$0xf]
    %v670 = vld [vmem:[#allocation7 + $0x38] sm:$0xf]
    %v671 = vld [vmem:[#allocation7 + $0x3c] sm:$0xf]
    %v673 = vlaneseq
    %v674 = vshrl.u32 %v673, 7
    %v675 = vsub.s32 0, %v674
    %v676 = vrot.slane %v76, %v675
    %v694 = vunpack.c.l.b16 %v656
    %v695 = vunpack.c.l.b16 %v657
    %v696 = vunpack.c.l.b16 %v658
    %v697 = vunpack.c.l.b16 %v659
    %v698 = vunpack.c.l.b16 %v660
    %v699 = vunpack.c.l.b16 %v661
    %v700 = vunpack.c.l.b16 %v662
    %v701 = vunpack.c.l.b16 %v663
    %v702 = vunpack.c.l.b16 %v664
    %v703 = vunpack.c.l.b16 %v665
    %v704 = vunpack.c.l.b16 %v666
    %v705 = vunpack.c.l.b16 %v667
    %v706 = vunpack.c.l.b16 %v668
    %v707 = vunpack.c.l.b16 %v669
    %v708 = vunpack.c.l.b16 %v670
    %v709 = vunpack.c.l.b16 %v671
    %v710 = vpack.c.b16 %v695, %v694
    %v711 = vpack.c.b16 %v697, %v696
    %v712 = vpack.c.b16 %v699, %v698
    %v713 = vpack.c.b16 %v701, %v700
    %v714 = vpack.c.b16 %v703, %v702
    %v715 = vpack.c.b16 %v705, %v704
    %v716 = vpack.c.b16 %v707, %v706
    %v717 = vpack.c.b16 %v709, %v708
    %726 = vmatprep.subr.bf16.mxu0 0
    %727 = vmatpush1.bf16.msra.mxu0 %v710
    %728 = vmatprep.subr.bf16.mxu0 0
    %729 = vmatpush1.bf16.msra.mxu0 %v711
    %730 = vmatprep.subr.bf16.mxu0 0
    %731 = vmatpush1.bf16.msra.mxu0 %v712
    %732 = vmatprep.subr.bf16.mxu0 0
    %733 = vmatpush1.bf16.msra.mxu0 %v713
    %734 = vmatprep.subr.bf16.mxu0 0
    %735 = vmatpush1.bf16.msra.mxu0 %v714
    %736 = vmatprep.subr.bf16.mxu0 0
    %737 = vmatpush1.bf16.msra.mxu0 %v715
    %738 = vmatprep.subr.bf16.mxu0 0
    %739 = vmatpush1.bf16.msra.mxu0 %v716
    %740 = vmatprep.subr.bf16.mxu0 0
    %741 = vmatpush1.bf16.msra.mxu0 %v717
    %742 = vmatprep.subr.bf16.mxu0 0
    %743 = vmatpush1.bf16.msra.mxu0 0
    %744 = vmatprep.subr.bf16.mxu0 0
    %745 = vmatpush1.bf16.msra.mxu0 0
    %746 = vmatprep.subr.bf16.mxu0 0
    %747 = vmatpush1.bf16.msra.mxu0 0
    %748 = vmatprep.subr.bf16.mxu0 0
    %749 = vmatpush1.bf16.msra.mxu0 0
    %750 = vmatprep.subr.bf16.mxu0 0
    %751 = vmatpush1.bf16.msra.mxu0 0
    %752 = vmatprep.subr.bf16.mxu0 0
    %753 = vmatpush1.bf16.msra.mxu0 0
    %754 = vmatprep.subr.bf16.mxu0 0
    %755 = vmatpush1.bf16.msra.mxu0 0
    %756 = vmatprep.subr.bf16.mxu0 0
    %757 = vmatpush1.bf16.msra.mxu0 0
    %758 = vmatprep.mubr.bf16.mxu0 0
    %759 = vmatmul.mubr.bf16.gmra.mrb[0].mxu0 %v655
    %v760 = vpop.f32.mrb[0].mxu0
    %v761 = vadd.f32 %v676, %v760
    %v762 = vpop.f32.mrb[0].mxu0
    %v763 = vpop.f32.mrb[0].mxu0
    %v764 = vpop.f32.mrb[0].mxu0
    %765 = vdwg.mxu0
    %v766 = vmax.f32 %v761, 0.0
    %v767 = vpack.c.bf16 %v766, %v766
    %v768 = vld [vmem:[#allocation8] sm:$0xf]
    %v769 = vld [vmem:[#allocation8 + $0x4] sm:$0xf]
    %v770 = vld [vmem:[#allocation8 + $0x8] sm:$0xf]
    %v771 = vld [vmem:[#allocation8 + $0xc] sm:$0xf]
    %v772 = vld [vmem:[#allocation8 + $0x10] sm:$0xf]
    %v773 = vld [vmem:[#allocation8 + $0x14] sm:$0xf]
    %v774 = vld [vmem:[#allocation8 + $0x18] sm:$0xf]
    %v775 = vld [vmem:[#allocation8 + $0x1c] sm:$0xf]
    %v776 = vld [vmem:[#allocation8 + $0x20] sm:$0xf]
    %v777 = vld [vmem:[#allocation8 + $0x24] sm:$0xf]
    %v778 = vld [vmem:[#allocation8 + $0x28] sm:$0xf]
    %v779 = vld [vmem:[#allocation8 + $0x2c] sm:$0xf]
    %v780 = vld [vmem:[#allocation8 + $0x30] sm:$0xf]
    %v781 = vld [vmem:[#allocation8 + $0x34] sm:$0xf]
    %v782 = vld [vmem:[#allocation8 + $0x38] sm:$0xf]
    %v783 = vld [vmem:[#allocation8 + $0x3c] sm:$0xf]
    %v785 = vlaneseq
    %v786 = vshrl.u32 %v785, 7
    %v787 = vsub.s32 0, %v786
    %v788 = vrot.slane %v77, %v787
    %v806 = vunpack.c.l.b16 %v768
    %v807 = vunpack.c.l.b16 %v769
    %v808 = vunpack.c.l.b16 %v770
    %v809 = vunpack.c.l.b16 %v771
    %v810 = vunpack.c.l.b16 %v772
    %v811 = vunpack.c.l.b16 %v773
    %v812 = vunpack.c.l.b16 %v774
    %v813 = vunpack.c.l.b16 %v775
    %v814 = vunpack.c.l.b16 %v776
    %v815 = vunpack.c.l.b16 %v777
    %v816 = vunpack.c.l.b16 %v778
    %v817 = vunpack.c.l.b16 %v779
    %v818 = vunpack.c.l.b16 %v780
    %v819 = vunpack.c.l.b16 %v781
    %v820 = vunpack.c.l.b16 %v782
    %v821 = vunpack.c.l.b16 %v783
    %v822 = vpack.c.b16 %v807, %v806
    %v823 = vpack.c.b16 %v809, %v808
    %v824 = vpack.c.b16 %v811, %v810
    %v825 = vpack.c.b16 %v813, %v812
    %v826 = vpack.c.b16 %v815, %v814
    %v827 = vpack.c.b16 %v817, %v816
    %v828 = vpack.c.b16 %v819, %v818
    %v829 = vpack.c.b16 %v821, %v820
    %838 = vmatprep.subr.bf16.mxu0 0
    %839 = vmatpush1.bf16.msra.mxu0 %v822
    %840 = vmatprep.subr.bf16.mxu0 0
    %841 = vmatpush1.bf16.msra.mxu0 %v823
    %842 = vmatprep.subr.bf16.mxu0 0
    %843 = vmatpush1.bf16.msra.mxu0 %v824
    %844 = vmatprep.subr.bf16.mxu0 0
    %845 = vmatpush1.bf16.msra.mxu0 %v825
    %846 = vmatprep.subr.bf16.mxu0 0
    %847 = vmatpush1.bf16.msra.mxu0 %v826
    %848 = vmatprep.subr.bf16.mxu0 0
    %849 = vmatpush1.bf16.msra.mxu0 %v827
    %850 = vmatprep.subr.bf16.mxu0 0
    %851 = vmatpush1.bf16.msra.mxu0 %v828
    %852 = vmatprep.subr.bf16.mxu0 0
    %853 = vmatpush1.bf16.msra.mxu0 %v829
    %854 = vmatprep.subr.bf16.mxu0 0
    %855 = vmatpush1.bf16.msra.mxu0 0
    %856 = vmatprep.subr.bf16.mxu0 0
    %857 = vmatpush1.bf16.msra.mxu0 0
    %858 = vmatprep.subr.bf16.mxu0 0
    %859 = vmatpush1.bf16.msra.mxu0 0
    %860 = vmatprep.subr.bf16.mxu0 0
    %861 = vmatpush1.bf16.msra.mxu0 0
    %862 = vmatprep.subr.bf16.mxu0 0
    %863 = vmatpush1.bf16.msra.mxu0 0
    %864 = vmatprep.subr.bf16.mxu0 0
    %865 = vmatpush1.bf16.msra.mxu0 0
    %866 = vmatprep.subr.bf16.mxu0 0
    %867 = vmatpush1.bf16.msra.mxu0 0
    %868 = vmatprep.subr.bf16.mxu0 0
    %869 = vmatpush1.bf16.msra.mxu0 0
    %870 = vmatprep.mubr.bf16.mxu0 0
    %871 = vmatmul.mubr.bf16.gmra.mrb[0].mxu0 %v767
    %v872 = vpop.f32.mrb[0].mxu0
    %v873 = vadd.f32 %v788, %v872
    %v874 = vpop.f32.mrb[0].mxu0
    %v875 = vpop.f32.mrb[0].mxu0
    %v876 = vpop.f32.mrb[0].mxu0
    %877 = vdwg.mxu0
    %878 = vst [vmem:[#allocation10] sm:$0xff] %v873
    // Predicated region
    $region38: #{tpu_custom_call.1} parent=1 // pred_check
      _
    $region39: #{tpu_custom_call.1} parent=1 // pred_check_branch
      %880 = sbr.rel (0) target = $region41
    $region40: #{tpu_custom_call.1} parent=1 // pred_region
      %s882 = ssub.s32 128, 128
      %883 = vsyncadd [#allocation4], %s882
      %s885 = sshll.u32 [#allocation10], 4
      %s886 = int_to_ptr.vmem [resolvable:$true] %s885
      %888 = dma.vmem_to_hbm [thread:$0]  %s886, 128, %s5, [#allocation4]
    $region41: #{tpu_custom_call.1} parent=1 // pred_fallthru
      _
    // Predicated region
    $region42: #{tpu_custom_call.1} parent=1 // pred_check
      _
    $region43: #{tpu_custom_call.1} parent=1 // pred_check_branch
      %890 = sbr.rel (0) target = $region45
    $region44: #{tpu_custom_call.1} parent=1 // pred_region
      %891 = dma.done [#allocation4], 128
    $region45: #{tpu_custom_call.1} parent=1 // pred_fallthru
      _
    %892 = vsyncpa [#allocation3], 1
    %893 = vsyncpa [#allocation6], 1
    %894 = vsyncpa [#allocation9], 1
    %895 = vsyncpa [#allocation4], 1

</llo_original>
